<compile_context>
chip_gen: v6e
topology: v6e:2x2x1
jax: 0.10.0
libtpu: 0.0.40
codegen_flags: <defaults>
</compile_context>

<pallas_src>
import jax
import jax.numpy as jnp
from jax.experimental import pallas as pl
from jax.experimental.pallas import tpu as pltpu


def encoder_gru_seq_kernel(tok_ref,      # scalar-prefetch: int32[T] in SMEM (used only by index_maps)
                           emb_row_ref,  # (1, 1, H) embedding row for this step's token
                           h0_ref,       # (1, H)   initial hidden state
                           w_ref,        # (2H, 4H) fused gate weights  [r_sum | z_sum | gi_n | gh_n]
                           b_ref,        # (1, 4H)  fused gate biases   [b_r   | b_z   | b_in | b_hn]
                           out_ref,      # (1, 1, H) per-step output (== new hidden)
                           h_scr):       # VMEM (1, H) hidden-state carry across grid steps
    H = h_scr.shape[-1]
    t = pl.program_id(0)

    @pl.when(t == 0)
    def _():
        h_scr[...] = h0_ref[...]

    x = emb_row_ref[0]                     # (1, H)
    h = h_scr[...]                         # (1, H)
    xh = jnp.concatenate([x, h], axis=-1)  # (1, 2H)

    # Single fused matmul on the MXU: g = [x|h] @ W_fused + b_fused   -> (1, 4H)
    g = jnp.dot(xh, w_ref[...], preferred_element_type=jnp.float32) + b_ref[...]

    # PyTorch GRU semantics (gate order r, z, n):
    #   r = sigmoid(W_ir x + b_ir + W_hr h + b_hr)          -> g[:, 0:H]   (biases pre-summed)
    #   z = sigmoid(W_iz x + b_iz + W_hz h + b_hz)          -> g[:, H:2H]
    #   n = tanh(W_in x + b_in + r * (W_hn h + b_hn))       -> g[:, 2H:3H], g[:, 3H:4H]
    #   h' = (1 - z) * n + z * h
    r = jax.nn.sigmoid(g[:, 0:H])
    z = jax.nn.sigmoid(g[:, H:2 * H])
    n = jnp.tanh(g[:, 2 * H:3 * H] + r * g[:, 3 * H:4 * H])
    h_new = (1.0 - z) * n + z * h

    h_scr[...] = h_new
    out_ref[0] = h_new.astype(out_ref.dtype)


def prepare_params(params):
    """One-time host-side packing of PyTorch-layout GRU params (hoisted out of the step loop)."""
    emb = params["embedding"].astype(jnp.float32)          # (V, H)
    V, H = emb.shape
    w_ih = params["weight_ih"].astype(jnp.float32)          # (3H, H), gate order r, z, n
    w_hh = params["weight_hh"].astype(jnp.float32)          # (3H, H)
    b_ih = params["bias_ih"].astype(jnp.float32)             # (3H,)
    b_hh = params["bias_hh"].astype(jnp.float32)             # (3H,)

    wi = w_ih.T                                              # (H, 3H) -> x @ wi gives [gi_r gi_z gi_n]
    wh = w_hh.T                                              # (H, 3H) -> h @ wh gives [gh_r gh_z gh_n]
    zeros = jnp.zeros((H, H), jnp.float32)
    # Fused (2H, 4H): rows 0..H-1 multiply x, rows H..2H-1 multiply h.
    # Columns: [ r_sum | z_sum | gi_n | gh_n ]
    top = jnp.concatenate([wi[:, 0:H], wi[:, H:2 * H], wi[:, 2 * H:3 * H], zeros], axis=1)
    bot = jnp.concatenate([wh[:, 0:H], wh[:, H:2 * H], zeros, wh[:, 2 * H:3 * H]], axis=1)
    w_fused = jnp.concatenate([top, bot], axis=0)            # (2H, 4H)

    b_fused = jnp.concatenate([
        b_ih[0:H] + b_hh[0:H],          # b_r (pre-summed)
        b_ih[H:2 * H] + b_hh[H:2 * H],  # b_z (pre-summed)
        b_ih[2 * H:3 * H],              # b_in
        b_hh[2 * H:3 * H],              # b_hn
    ]).reshape(1, 4 * H)

    emb3 = emb.reshape(V, 1, H)          # so a (1, 1, H) block's trailing dims equal the array dims
    return {"emb3": emb3, "w_fused": w_fused, "b_fused": b_fused, "V": V, "H": H}


def encoder_rnn_run(tokens, hidden, prepped):
    """Run the GRU over a whole token sequence in ONE pallas_call.

    tokens: int32[T]; hidden: f32[1,1,H].
    Returns (outputs f32[T,1,H], final hidden f32[1,1,H]).
    """
    emb3, w, b = prepped["emb3"], prepped["w_fused"], prepped["b_fused"]
    V, H = prepped["V"], prepped["H"]
    T = tokens.shape[0]

    tokens = jnp.clip(tokens.astype(jnp.int32), 0, V - 1)   # guard the data-dependent DMA
    h0 = hidden.reshape(1, H).astype(jnp.float32)

    out = pl.pallas_call(
        encoder_gru_seq_kernel,
        out_shape=jax.ShapeDtypeStruct((T, 1, H), jnp.float32),
        grid_spec=pltpu.PrefetchScalarGridSpec(
            num_scalar_prefetch=1,
            grid=(T,),
            in_specs=[
                # one embedding row per step, selected by the prefetched token id
                pl.BlockSpec((1, 1, H), lambda t, tok: (tok[t], 0, 0)),
                # initial hidden, constant block (only consumed at t == 0)
                pl.BlockSpec((1, H), lambda t, tok: (0, 0)),
                # fused weights / bias: constant block index -> DMA'd once, resident for all T
                pl.BlockSpec((2 * H, 4 * H), lambda t, tok: (0, 0)),
                pl.BlockSpec((1, 4 * H), lambda t, tok: (0, 0)),
            ],
            out_specs=pl.BlockSpec((1, 1, H), lambda t, tok: (t, 0, 0)),
            scratch_shapes=[pltpu.VMEM((1, H), jnp.float32)],
        ),
        compiler_params=pltpu.CompilerParams(
            dimension_semantics=("arbitrary",)),  # sequential recurrence
    )(tokens, emb3, h0, w, b)

    return out, out[-1].reshape(1, 1, H)


def encoder_rnn_forward(token, hidden, prepped):
    """Single-step forward matching the PyTorch module: returns (output[1,1,H], hidden[1,1,H])."""
    H = prepped["H"]
    out, h_new = encoder_rnn_run(token.reshape(1), hidden, prepped)
    return out.reshape(1, 1, H), h_new


def reference_forward_seq(tokens, hidden, params):
    """Pure-JAX reference mirroring torch GRU semantics, unrolled over the sequence."""
    emb = params["embedding"]
    H = emb.shape[1]
    w_ih, w_hh = params["weight_ih"], params["weight_hh"]
    b_ih, b_hh = params["bias_ih"], params["bias_hh"]
    h = hidden.reshape(1, H)
    outs = []
    for t in range(tokens.shape[0]):
        x = emb[tokens[t]].reshape(1, H)
        gi = x @ w_ih.T + b_ih
        gh = h @ w_hh.T + b_hh
        r = jax.nn.sigmoid(gi[:, 0:H] + gh[:, 0:H])
        z = jax.nn.sigmoid(gi[:, H:2 * H] + gh[:, H:2 * H])
        n = jnp.tanh(gi[:, 2 * H:3 * H] + r * gh[:, 2 * H:3 * H])
        h = (1.0 - z) * n + z * h
        outs.append(h)
    return jnp.stack(outs), h.reshape(1, 1, H)


if __name__ == "__main__":
    INPUT_SIZE = 16   # vocab size
    HIDDEN = 32
    SEQ = 8

    key = jax.random.PRNGKey(0)
    k_emb, k_wih, k_whh, k_bih, k_bhh, k_h, k_tok = jax.random.split(key, 7)
    bound = 1.0 / jnp.sqrt(HIDDEN)
    params = {
        "embedding": jax.random.normal(k_emb, (INPUT_SIZE, HIDDEN), jnp.float32),
        "weight_ih": jax.random.uniform(k_wih, (3 * HIDDEN, HIDDEN), jnp.float32, -bound, bound),
        "weight_hh": jax.random.uniform(k_whh, (3 * HIDDEN, HIDDEN), jnp.float32, -bound, bound),
        "bias_ih":   jax.random.uniform(k_bih, (3 * HIDDEN,), jnp.float32, -bound, bound),
        "bias_hh":   jax.random.uniform(k_bhh, (3 * HIDDEN,), jnp.float32, -bound, bound),
    }
    prepped = prepare_params(params)   # one-time packing, hoisted out of the step loop

    tokens = jax.random.randint(k_tok, (SEQ,), 0, INPUT_SIZE, dtype=jnp.int32)
    hidden0 = jnp.zeros((1, 1, HIDDEN), jnp.float32)                  # EncoderRNN.initHidden()
    hidden = jax.random.normal(k_h, (1, 1, HIDDEN), jnp.float32)      # exercise the recurrent path

    # --- single step (matches the PyTorch module's forward signature) ---
    out1, h1 = encoder_rnn_forward(tokens[:1], hidden, prepped)
    out1, h1 = jax.block_until_ready((out1, h1))
    ref_out1, ref_h1 = reference_forward_seq(tokens[:1], hidden, params)
    assert out1.shape == (1, 1, HIDDEN) and h1.shape == (1, 1, HIDDEN)
    assert jnp.allclose(out1, ref_out1[0].reshape(1, 1, HIDDEN), atol=1e-4, rtol=1e-4)
    assert jnp.allclose(h1, ref_h1, atol=1e-4, rtol=1e-4)

    # --- full sequence in one pallas_call (recurrence inside the kernel) ---
    outs, h_last = encoder_rnn_run(tokens, hidden, prepped)
    outs, h_last = jax.block_until_ready((outs, h_last))
    ref_outs, ref_h_last = reference_forward_seq(tokens, hidden, params)
    assert outs.shape == (SEQ, 1, HIDDEN) and h_last.shape == (1, 1, HIDDEN)
    assert jnp.allclose(outs, ref_outs, atol=1e-4, rtol=1e-4)
    assert jnp.allclose(h_last, ref_h_last, atol=1e-4, rtol=1e-4)

    # --- also run from the zero initial hidden (initHidden) ---
    outs0, h0_last = encoder_rnn_run(tokens, hidden0, prepped)
    outs0, h0_last = jax.block_until_ready((outs0, h0_last))
    ref_outs0, ref_h0_last = reference_forward_seq(tokens, hidden0, params)
    assert jnp.allclose(outs0, ref_outs0, atol=1e-4, rtol=1e-4)
    assert jnp.allclose(h0_last, ref_h0_last, atol=1e-4, rtol=1e-4)

    print("KERNEL_OK")
</pallas_src>

<mosaic_0001>
module attributes {stable_mosaic.version = 11 : i64} {
  func.func @encoder_gru_seq_kernel(%arg0: i32, %arg1: memref<1xi32, #tpu.memory_space<smem>>, %arg2: memref<1x1x32xf32, #tpu.memory_space<vmem>>, %arg3: memref<1x32xf32, #tpu.memory_space<vmem>>, %arg4: memref<64x128xf32, #tpu.memory_space<vmem>>, %arg5: memref<1x128xf32, #tpu.memory_space<vmem>>, %arg6: memref<1x1x32xf32, #tpu.memory_space<vmem>>, %arg7: memref<1x32xf32, #tpu.memory_space<vmem>>) attributes {dimension_semantics = [#tpu.dimension_semantics<arbitrary>], iteration_bounds = array<i64: 1>, scalar_prefetch = 1 : i64, scratch_operands = 1 : i64, tpu.core_type = #tpu.core_type<tc>, window_params = [{transform_indices = @transform_0, window_bounds = array<i64: 1, 1, 32>}, {pipeline_mode = #tpu.pipeline_mode<synchronous>, transform_indices = @transform_1, window_bounds = array<i64: 1, 32>}, {pipeline_mode = #tpu.pipeline_mode<synchronous>, transform_indices = @transform_2, window_bounds = array<i64: 64, 128>}, {pipeline_mode = #tpu.pipeline_mode<synchronous>, transform_indices = @transform_3, window_bounds = array<i64: 1, 128>}, {transform_indices = @transform_4, window_bounds = array<i64: 1, 1, 32>}]} {
    %c0_i32 = arith.constant 0 : i32
    %0 = arith.cmpi eq, %arg0, %c0_i32 : i32
    %1 = arith.extui %0 : i1 to i32
    %c0_i32_0 = arith.constant 0 : i32
    %2 = arith.cmpi ne, %1, %c0_i32_0 : i32
    scf.if %2 {
      %c0_17 = arith.constant 0 : index
      %c0_18 = arith.constant 0 : index
      %37 = vector.load %arg3[%c0_17, %c0_18] : memref<1x32xf32, #tpu.memory_space<vmem>>, vector<1x32xf32>
      %c0_19 = arith.constant 0 : index
      %c0_20 = arith.constant 0 : index
      %38 = vector.load %arg7[%c0_19, %c0_20] : memref<1x32xf32, #tpu.memory_space<vmem>>, vector<1x32xf32>
      tpu.vector_store %arg7[%c0_19, %c0_20], %37 {strides = array<i32>} : memref<1x32xf32, #tpu.memory_space<vmem>>, vector<1x32xf32>,
    } else {
    }
    %c0 = arith.constant 0 : index
    %c0_1 = arith.constant 0 : index
    %c0_2 = arith.constant 0 : index
    %3 = vector.load %arg2[%c0, %c0_1, %c0_2] : memref<1x1x32xf32, #tpu.memory_space<vmem>>, vector<1x1x32xf32>
    %4 = vector.shape_cast %3 : vector<1x1x32xf32> to vector<1x32xf32>
    %c0_3 = arith.constant 0 : index
    %c0_4 = arith.constant 0 : index
    %5 = vector.load %arg7[%c0_3, %c0_4] : memref<1x32xf32, #tpu.memory_space<vmem>>, vector<1x32xf32>
    %6 = tpu.concatenate %4, %5 in 1 : vector<1x32xf32>, vector<1x32xf32> -> vector<1x64xf32>
    %c0_5 = arith.constant 0 : index
    %c0_6 = arith.constant 0 : index
    %7 = vector.load %arg4[%c0_5, %c0_6] : memref<64x128xf32, #tpu.memory_space<vmem>>, vector<64x128xf32>
    %cst = arith.constant dense<0.000000e+00> : vector<1x128xf32>
    %8 = tpu.matmul %6, %7, %cst {dimension_numbers = #tpu.dot_dimension_numbers<[1], [0], [0], [1], [0, 0, 1, 1], [], []>} : vector<1x64xf32>, vector<64x128xf32>, vector<1x128xf32> -> vector<1x128xf32>
    %c0_7 = arith.constant 0 : index
    %c0_8 = arith.constant 0 : index
    %9 = vector.load %arg5[%c0_7, %c0_8] : memref<1x128xf32, #tpu.memory_space<vmem>>, vector<1x128xf32>
    %10 = arith.addf %8, %9 : vector<1x128xf32>
    %11 = vector.extract_strided_slice %10 {offsets = [0, 0], sizes = [1, 32], strides = [1, 1]} : vector<1x128xf32> to vector<1x32xf32>
    %12 = arith.negf %11 : vector<1x32xf32>
    %13 = math.exp %12 : vector<1x32xf32>
    %cst_9 = arith.constant 1.000000e+00 : f32
    %14 = vector.broadcast %cst_9 : f32 to vector<1x32xf32>
    %15 = arith.addf %14, %13 : vector<1x32xf32>
    %16 = arith.divf %14, %15 : vector<1x32xf32>
    %17 = vector.extract_strided_slice %10 {offsets = [0, 32], sizes = [1, 32], strides = [1, 1]} : vector<1x128xf32> to vector<1x32xf32>
    %18 = arith.negf %17 : vector<1x32xf32>
    %19 = math.exp %18 : vector<1x32xf32>
    %cst_10 = arith.constant 1.000000e+00 : f32
    %20 = vector.broadcast %cst_10 : f32 to vector<1x32xf32>
    %21 = arith.addf %20, %19 : vector<1x32xf32>
    %22 = arith.divf %20, %21 : vector<1x32xf32>
    %23 = vector.extract_strided_slice %10 {offsets = [0, 64], sizes = [1, 32], strides = [1, 1]} : vector<1x128xf32> to vector<1x32xf32>
    %24 = vector.extract_strided_slice %10 {offsets = [0, 96], sizes = [1, 32], strides = [1, 1]} : vector<1x128xf32> to vector<1x32xf32>
    %25 = arith.mulf %16, %24 : vector<1x32xf32>
    %26 = arith.addf %23, %25 : vector<1x32xf32>
    %27 = math.tanh %26 : vector<1x32xf32>
    %cst_11 = arith.constant 1.000000e+00 : f32
    %28 = vector.broadcast %cst_11 : f32 to vector<1x32xf32>
    %29 = arith.subf %28, %22 : vector<1x32xf32>
    %30 = arith.mulf %29, %27 : vector<1x32xf32>
    %31 = arith.mulf %22, %5 : vector<1x32xf32>
    %32 = arith.addf %30, %31 : vector<1x32xf32>
    %c0_12 = arith.constant 0 : index
    %c0_13 = arith.constant 0 : index
    %33 = vector.load %arg7[%c0_12, %c0_13] : memref<1x32xf32, #tpu.memory_space<vmem>>, vector<1x32xf32>
    tpu.vector_store %arg7[%c0_12, %c0_13], %32 {strides = array<i32>} : memref<1x32xf32, #tpu.memory_space<vmem>>, vector<1x32xf32>,
    %c0_14 = arith.constant 0 : index
    %c0_15 = arith.constant 0 : index
    %c0_16 = arith.constant 0 : index
    %34 = vector.load %arg6[%c0_14, %c0_15, %c0_16] : memref<1x1x32xf32, #tpu.memory_space<vmem>>, vector<1x1x32xf32>
    %35 = vector.shape_cast %34 : vector<1x1x32xf32> to vector<1x32xf32>
    %36 = vector.shape_cast %32 : vector<1x32xf32> to vector<1x1x32xf32>
    tpu.vector_store %arg6[%c0_14, %c0_15, %c0_16], %36 {strides = array<i32>} : memref<1x1x32xf32, #tpu.memory_space<vmem>>, vector<1x1x32xf32>,
    return
  }
  func.func @transform_0(%arg0: i32, %arg1: memref<1xi32, #tpu.memory_space<smem>>) -> (i32, i32, i32) {
    %0 = arith.index_cast %arg0 : i32 to index
    %1 = memref.load %arg1[%0] : memref<1xi32, #tpu.memory_space<smem>>
    %c0_i32 = arith.constant 0 : i32
    %c0_i32_0 = arith.constant 0 : i32
    %c0_i32_1 = arith.constant 0 : i32
    return %1, %c0_i32, %c0_i32_0 : i32, i32, i32
  }
  func.func @transform_1(%arg0: i32, %arg1: memref<1xi32, #tpu.memory_space<smem>>) -> (i32, i32) {
    %c0_i32 = arith.constant 0 : i32
    %c0_i32_0 = arith.constant 0 : i32
    %c0_i32_1 = arith.constant 0 : i32
    return %c0_i32, %c0_i32_0 : i32, i32
  }
  func.func @transform_2(%arg0: i32, %arg1: memref<1xi32, #tpu.memory_space<smem>>) -> (i32, i32) {
    %c0_i32 = arith.constant 0 : i32
    %c0_i32_0 = arith.constant 0 : i32
    %c0_i32_1 = arith.constant 0 : i32
    return %c0_i32, %c0_i32_0 : i32, i32
  }
  func.func @transform_3(%arg0: i32, %arg1: memref<1xi32, #tpu.memory_space<smem>>) -> (i32, i32) {
    %c0_i32 = arith.constant 0 : i32
    %c0_i32_0 = arith.constant 0 : i32
    %c0_i32_1 = arith.constant 0 : i32
    return %c0_i32, %c0_i32_0 : i32, i32
  }
  func.func @transform_4(%arg0: i32, %arg1: memref<1xi32, #tpu.memory_space<smem>>) -> (i32, i32, i32) {
    %c0_i32 = arith.constant 0 : i32
    %c0_i32_0 = arith.constant 0 : i32
    %c0_i32_1 = arith.constant 0 : i32
    return %arg0, %c0_i32, %c0_i32_0 : i32, i32, i32
  }
}

</mosaic_0001>

<llo_original>
// kernel: tpu_custom_call.1
$region0: #{tpu_custom_call.1}
  #allocation0 [shape = 'u32[]', space=smem, size = 0x4, offset = 0x4, fixed_abs, tag = 'smem constant byte address 0x4 - core index']
  #allocation1 [shape = 'u32[144,128]{1,0:T(1,128)}', space=vmem, size = 0x12000, scoped, tag = 'internal scratch']
  #allocation2 [shape = 'f32[1,32]{1,0:T(1,128)}', space=vmem, size = 0x200, scoped, tag = 'scratch operand']
  #allocation3 [shape = 's32[1]{0}', space=sflag, size = 0x4, scoped, tag = 'scoped memory for tpu_custom_call.1']
  #allocation4 [shape = 's32[1]{0:T(128)S(6)}', space=smem, size = 0x200, scoped, tag = 'prefetched SMEM operand 0']
  %s0 = inlined_call_operand.<no memory space> [shape: s32[1], index: 0, kind: input, shape index: {}]
  %s1 = inlined_call_operand.hbm [shape: f32[16,1,32], index: 1, kind: input, shape index: {}]
  %s2 = inlined_call_operand.vmem [shape: f32[1,32], index: 2, kind: input, shape index: {}]
  %s3 = inlined_call_operand.hbm [shape: f32[64,128], index: 3, kind: input, shape index: {}]
  %s4 = inlined_call_operand.vmem [shape: f32[1,128], index: 4, kind: input, shape index: {}]
  %s5 = inlined_call_operand.hbm [shape: f32[1,1,32], index: 5, kind: output, shape index: {}]
  %s6 = sld [smem:[#allocation0]]
  $region38: #{tpu_custom_call.1} parent=0
    _
  %s8 = ssub.s32 1, %s6
  %s9 = scalar_select 0, %s8, %s6
  %10 = sst [smem:[#allocation4]] %s0
  $region1: #{tpu_custom_call.1} parent=0
    #allocation5 [shape = 'u8[512]{0}', space=vmem, size = 0x400, scoped, tag = 'input window, operand 1, single buffered']
    #allocation6 [shape = 's32[1]{0}', space=sflag, size = 0x4, scoped, tag = 'scoped memory for tpu_custom_call.1']
    #allocation7 [shape = 's32[1]{0}', space=sflag, size = 0x4, scoped, tag = 'scoped memory for tpu_custom_call.1']
    #allocation8 [shape = 'u8[32768]{0}', space=vmem, size = 0x8000, scoped, tag = 'input window, operand 3, single buffered']
    #allocation9 [shape = 's32[1]{0}', space=sflag, size = 0x4, scoped, tag = 'scoped memory for tpu_custom_call.1']
    #allocation10 [shape = 'u8[512]{0}', space=vmem, size = 0x400, scoped, tag = 'output window, operand 0, single buffered']
    %11 = vsyncpa [#allocation6], 0
    %12 = vsyncpa [#allocation9], 0
    %13 = vsyncpa [#allocation7], 0
    // Predicated region
    $region2: #{tpu_custom_call.1} parent=1 // pred_check
      _
    $region3: #{tpu_custom_call.1} parent=1 // pred_check_branch
      %15 = sbr.rel (0) target = $region5
    $region4: #{tpu_custom_call.1} parent=1 // pred_region
      %s16 = sld [smem:[#allocation4]]
      %s18 = ssub.s32 16, 16
      %19 = vsyncadd [#allocation6], %s18
      %s20 = smul.addr %s16, 16
      %s21 = scalar_lea.hbm %s1, %s20
      %s23 = sshll.u32 [#allocation5], 4
      %s24 = int_to_ptr.vmem [resolvable:$true] %s23
      %26 = dma.hbm_to_vmem [thread:$0]  %s21, 16, %s24, [#allocation6]
    $region5: #{tpu_custom_call.1} parent=1 // pred_fallthru
      _
    // Predicated region
    $region6: #{tpu_custom_call.1} parent=1 // pred_check
      _
    $region7: #{tpu_custom_call.1} parent=1 // pred_check_branch
      %28 = sbr.rel (0) target = $region9
    $region8: #{tpu_custom_call.1} parent=1 // pred_region
      _
    $region9: #{tpu_custom_call.1} parent=1 // pred_fallthru
      _
    // Predicated region
    $region10: #{tpu_custom_call.1} parent=1 // pred_check
      _
    $region11: #{tpu_custom_call.1} parent=1 // pred_check_branch
      %30 = sbr.rel (0) target = $region13
    $region12: #{tpu_custom_call.1} parent=1 // pred_region
      %s32 = ssub.s32 1024, 1024
      %33 = vsyncadd [#allocation9], %s32
      %s34 = sshll.u32 [#allocation8], 4
      %s35 = int_to_ptr.vmem [resolvable:$true] %s34
      %40 = dma.hbm_to_vmem [thread:$0]  %s3, 1024, %s35, [#allocation9], 128, 128, 8
    $region13: #{tpu_custom_call.1} parent=1 // pred_fallthru
      _
    // Predicated region
    $region14: #{tpu_custom_call.1} parent=1 // pred_check
      _
    $region15: #{tpu_custom_call.1} parent=1 // pred_check_branch
      %42 = sbr.rel (0) target = $region17
    $region16: #{tpu_custom_call.1} parent=1 // pred_region
      _
    $region17: #{tpu_custom_call.1} parent=1 // pred_fallthru
      _
    // Predicated region
    $region18: #{tpu_custom_call.1} parent=1 // pred_check
      _
    $region19: #{tpu_custom_call.1} parent=1 // pred_check_branch
      %44 = sbr.rel (0) target = $region21
    $region20: #{tpu_custom_call.1} parent=1 // pred_region
      %45 = dma.done [#allocation6], 16
    $region21: #{tpu_custom_call.1} parent=1 // pred_fallthru
      _
    // Predicated region
    $region22: #{tpu_custom_call.1} parent=1 // pred_check
      _
    $region23: #{tpu_custom_call.1} parent=1 // pred_check_branch
      %47 = sbr.rel (0) target = $region25
    $region24: #{tpu_custom_call.1} parent=1 // pred_region
      %48 = dma.done [#allocation9], 1024
    $region25: #{tpu_custom_call.1} parent=1 // pred_fallthru
      _
    %s49 = sld [smem:[#allocation4]]
    %p50 = scmp.eq.s32.totalorder 0, 0
    // Predicated region
    $region26: #{tpu_custom_call.1} parent=1 // pred_check
      %p51 = pneg %p50
    $region27: #{tpu_custom_call.1} parent=1 // pred_check_branch
      %53 = sbr.rel (%p51) target = $region29
    $region28: #{tpu_custom_call.1} parent=1 // pred_region
      %v54 = vld [vmem:[%s2] sm:$0x1]
      %vm55 = vcmask 253952
      %56 = vst.msk [vmem:[#allocation2] sm:$0x1] %vm55, %v54
    $region29: #{tpu_custom_call.1} parent=1 // pred_fallthru
      _
    %v57 = vld [vmem:[#allocation5] sm:$0x1]
    %v58 = vld [vmem:[#allocation2] sm:$0x1]
    %v60 = vlaneseq
    %v61 = vshrl.u32 %v60, 7
    %v62 = vsub.s32 0, %v61
    %v63 = vrot.slane %v58, %v62
    %64 = vrot.lane.b32.xlu0 %v63, 32
    %v65 = vpop.permute.xlu0 %64
    %vm67 = vcmask 261120
    %v68 = vsel %vm67, %v57, %v65
    %v69 = vld [vmem:[#allocation8] sm:$0xff]
    %v70 = vld [vmem:[#allocation8 + $0x8] sm:$0xff]
    %v71 = vld [vmem:[#allocation8 + $0x10] sm:$0xff]
    %v72 = vld [vmem:[#allocation8 + $0x18] sm:$0xff]
    %v73 = vld [vmem:[#allocation8 + $0x20] sm:$0xff]
    %v74 = vld [vmem:[#allocation8 + $0x28] sm:$0xff]
    %v75 = vld [vmem:[#allocation8 + $0x30] sm:$0xff]
    %v76 = vld [vmem:[#allocation8 + $0x38] sm:$0xff]
    %v77 = vld [vmem:[%s4] sm:$0x1]
    %vm78 = vcmask 523264
    %v80 = vsel %vm78, %v68, 0
    %82 = vmatprep.subr.mxu0 0.0
    %83 = vmatpush1.msra.mxu0 0.0
    %84 = vmatprep.subr.mxu0 0.0
    %85 = vmatpush1.msra.mxu0 0.0
    %86 = vmatprep.subr.mxu0 0.0
    %87 = vmatpush1.msra.mxu0 0.0
    %88 = vmatprep.subr.mxu0 0.0
    %89 = vmatpush1.msra.mxu0 0.0
    %90 = vmatprep.subr.mxu0 0.0
    %91 = vmatpush1.msra.mxu0 0.0
    %92 = vmatprep.subr.mxu0 0.0
    %93 = vmatpush1.msra.mxu0 0.0
    %94 = vmatprep.subr.mxu0 0.0
    %95 = vmatpush1.msra.mxu0 0.0
    %96 = vmatprep.subr.mxu0 0.0
    %97 = vmatpush1.msra.mxu0 0.0
    %98 = vmatprep.subr.mxu0 0.0
    %99 = vmatpush1.msra.mxu0 %v76
    %100 = vmatprep.subr.mxu0 0.0
    %101 = vmatpush1.msra.mxu0 %v75
    %102 = vmatprep.subr.mxu0 0.0
    %103 = vmatpush1.msra.mxu0 %v74
    %104 = vmatprep.subr.mxu0 0.0
    %105 = vmatpush1.msra.mxu0 %v73
    %106 = vmatprep.subr.mxu0 0.0
    %107 = vmatpush1.msra.mxu0 %v72
    %108 = vmatprep.subr.mxu0 0.0
    %109 = vmatpush1.msra.mxu0 %v71
    %110 = vmatprep.subr.mxu0 0.0
    %111 = vmatpush1.msra.mxu0 %v70
    %112 = vmatprep.subr.mxu0 0.0
    %113 = vmatpush1.msra.mxu0 %v69
    %114 = vmatprep.subr.mxu0 0.0
    %115 = vmatpush2.msra.mxu0 0.0
    %116 = vmatprep.subr.mxu0 0.0
    %117 = vmatpush2.msra.mxu0 0.0
    %118 = vmatprep.subr.mxu0 0.0
    %119 = vmatpush2.msra.mxu0 0.0
    %120 = vmatprep.subr.mxu0 0.0
    %121 = vmatpush2.msra.mxu0 0.0
    %122 = vmatprep.subr.mxu0 0.0
    %123 = vmatpush2.msra.mxu0 0.0
    %124 = vmatprep.subr.mxu0 0.0
    %125 = vmatpush2.msra.mxu0 0.0
    %126 = vmatprep.subr.mxu0 0.0
    %127 = vmatpush2.msra.mxu0 0.0
    %128 = vmatprep.subr.mxu0 0.0
    %129 = vmatpush2.msra.mxu0 0.0
    %130 = vmatprep.subr.mxu0 0.0
    %131 = vmatpush2.msra.mxu0 0.0
    %132 = vmatprep.subr.mxu0 0.0
    %133 = vmatpush2.msra.mxu0 0.0
    %134 = vmatprep.subr.mxu0 0.0
    %135 = vmatpush2.msra.mxu0 0.0
    %136 = vmatprep.subr.mxu0 0.0
    %137 = vmatpush2.msra.mxu0 0.0
    %138 = vmatprep.subr.mxu0 0.0
    %139 = vmatpush2.msra.mxu0 0.0
    %140 = vmatprep.subr.mxu0 0.0
    %141 = vmatpush2.msra.mxu0 0.0
    %142 = vmatprep.subr.mxu0 0.0
    %143 = vmatpush2.msra.mxu0 0.0
    %144 = vmatprep.subr.mxu0 0.0
    %145 = vmatpush2.msra.mxu0 0.0
    %146 = vmatprep.mubr.f32.mxu0 0.0
    %147 = vmatmul.mubr.f32.gmra.mxu0 %v80
    %v148 = vpop.f32.mrf.mxu0
    %v149 = vadd.f32 %v77, %v148
    %v150 = vpop.f32.mrf.mxu0
    %151 = vdwg.mxu0
    %v152 = vxor.u32 %v149, 2147483648
    %v153 = vmul.f32 %v152, 1.442695
    %v154 = vpow.pop %v153
    %v155 = vadd.f32 %v154, 1.0
    %v156 = vrcp.pop %v155
    %v157 = vmul.f32 1.0, %v156
    %159 = vrot.lane.b32.xlu0 %v149, 32
    %v160 = vpop.permute.xlu0 %159
    %v162 = vmul.f32 %v157, %v160
    %164 = vrot.lane.b32.xlu0 %v162, 64
    %v165 = vpop.permute.xlu0 %164
    %v167 = vadd.f32 %v149, %v165
    %v168 = vtanh.pop %v167
    %v169 = vsub.f32 1.0, %v157
    %171 = vrot.lane.b32.xlu0 %v168, 96
    %v172 = vpop.permute.xlu0 %171
    %v174 = vmul.f32 %v169, %v172
    %v175 = vmul.f32 %v157, %v65
    %v176 = vadd.f32 %v174, %v175
    %178 = vrot.lane.b32.xlu0 %v176, 96
    %v179 = vpop.permute.xlu0 %178
    %vm181 = vcmask 253952
    %182 = vst.msk [vmem:[#allocation2] sm:$0x1] %vm181, %v179
    %183 = vst.msk [vmem:[#allocation10] sm:$0x1] %vm181, %v179
    // Predicated region
    $region30: #{tpu_custom_call.1} parent=1 // pred_check
      _
    $region31: #{tpu_custom_call.1} parent=1 // pred_check_branch
      %185 = sbr.rel (0) target = $region33
    $region32: #{tpu_custom_call.1} parent=1 // pred_region
      %s187 = ssub.s32 16, 16
      %188 = vsyncadd [#allocation7], %s187
      %s190 = sshll.u32 [#allocation10], 4
      %s191 = int_to_ptr.vmem [resolvable:$true] %s190
      %193 = dma.vmem_to_hbm [thread:$0]  %s191, 16, %s5, [#allocation7]
    $region33: #{tpu_custom_call.1} parent=1 // pred_fallthru
      _
    // Predicated region
    $region34: #{tpu_custom_call.1} parent=1 // pred_check
      _
    $region35: #{tpu_custom_call.1} parent=1 // pred_check_branch
      %195 = sbr.rel (0) target = $region37
    $region36: #{tpu_custom_call.1} parent=1 // pred_region
      %196 = dma.done [#allocation7], 16
    $region37: #{tpu_custom_call.1} parent=1 // pred_fallthru
      _
    %197 = vsyncpa [#allocation6], 1
    %198 = vsyncpa [#allocation9], 1
    %199 = vsyncpa [#allocation7], 1

</llo_original>
